<compile_context>
chip_gen: v5e
topology: v5e:2x2
jax: 0.10.0
libtpu: 0.0.40
codegen_flags: <defaults>
</compile_context>

<pallas_src>
import jax
import jax.numpy as jnp
from jax.experimental import pallas as pl
from jax.experimental.pallas import tpu as pltpu

_CHUNK_BYTES_THRESHOLD = 4 * 1024 * 1024  # only chunk DMAs for >= 4 MiB tensors
_MAX_CHUNKS = 8


def _make_dma_copy_kernel(chunk_indices):
    """Build a kernel that copies x -> o with one DMA per (static) chunk."""

    def kernel(x_ref, o_ref, sem):
        copies = []
        for i, idx in enumerate(chunk_indices):
            src = x_ref if idx is None else x_ref.at[idx]
            dst = o_ref if idx is None else o_ref.at[idx]
            cp = pltpu.make_async_copy(src, dst, sem.at[i])
            cp.start()
            copies.append(cp)
        # All DMAs are in flight before the first wait -> they overlap.
        for cp in copies:
            cp.wait()

    return kernel


def _chunk_plan(shape, itemsize):
    """Static plan: list of index-tuples, or [None] for one full-array DMA."""
    total_bytes = itemsize
    for d in shape:
        total_bytes *= d
    if total_bytes < _CHUNK_BYTES_THRESHOLD:
        return [None]
    # Chunk along the first axis with extent >= 2; every axis before it has
    # extent 1 and is kept as a static size-1 slice so src/dst shapes match.
    chunk_axis = None
    for ax, d in enumerate(shape):
        if d >= 2:
            chunk_axis = ax
            break
    if chunk_axis is None:
        return [None]
    d = shape[chunk_axis]
    n_chunks = min(_MAX_CHUNKS, d)
    base, rem = divmod(d, n_chunks)
    indices = []
    start = 0
    for i in range(n_chunks):
        size = base + (1 if i < rem else 0)
        idx = tuple(pl.ds(0, 1) for _ in range(chunk_axis)) + (pl.ds(start, size),)
        indices.append(idx)
        start += size
    return indices


def target_pre_forward(x):
    """Identity forward of `target_pre`, done as a direct HBM->HBM DMA."""
    orig_shape = x.shape
    if x.size == 0:
        return x  # nothing to copy
    if x.ndim == 0:
        x = x.reshape(1)  # 0-d -> 1-d so the DMA has a well-formed shape

    itemsize = jnp.dtype(x.dtype).itemsize
    total_bytes = int(x.size) * itemsize
    chunk_indices = _chunk_plan(x.shape, itemsize)

    out = pl.pallas_call(
        _make_dma_copy_kernel(chunk_indices),
        out_shape=jax.ShapeDtypeStruct(x.shape, x.dtype),
        in_specs=[pl.BlockSpec(memory_space=pl.ANY)],   # raw HBM ref, no auto-DMA
        out_specs=pl.BlockSpec(memory_space=pl.ANY),    # raw HBM ref, no auto-DMA
        scratch_shapes=[pltpu.SemaphoreType.DMA((len(chunk_indices),))],
        cost_estimate=pl.CostEstimate(
            flops=0, transcendentals=0, bytes_accessed=2 * total_bytes),
    )(x)
    return out.reshape(orig_shape)


if __name__ == "__main__":
    key = jax.random.PRNGKey(0)

    # Primary small NCHW-like input consistent with a conv-style module interface.
    x = jax.random.normal(key, (2, 4, 16, 16), dtype=jnp.float32)
    y = jax.block_until_ready(target_pre_forward(x))
    assert y.shape == x.shape and y.dtype == x.dtype
    assert bool(jnp.all(y == x))

    # Chunked-DMA path with a leading unit axis (chunks along axis 1).
    x2 = jax.random.normal(jax.random.PRNGKey(1), (1, 600, 2048), dtype=jnp.float32)
    y2 = jax.block_until_ready(target_pre_forward(x2))
    assert y2.shape == x2.shape and y2.dtype == x2.dtype
    assert bool(jnp.all(y2 == x2))

    # Odd, non-128-multiple sizes and a packed dtype -- DMA has no layout concerns.
    x3 = jax.random.normal(jax.random.PRNGKey(2), (3, 5, 7), dtype=jnp.bfloat16)
    y3 = jax.block_until_ready(target_pre_forward(x3))
    assert y3.shape == x3.shape and y3.dtype == x3.dtype
    assert bool(jnp.all(y3 == x3))

    # Chunked-DMA path along axis 0.
    x4 = jax.random.normal(jax.random.PRNGKey(3), (16, 512, 256), dtype=jnp.float32)
    y4 = jax.block_until_ready(target_pre_forward(x4))
    assert y4.shape == x4.shape and y4.dtype == x4.dtype
    assert bool(jnp.all(y4 == x4))

    print("KERNEL_OK")
</pallas_src>

<mosaic_0001>
module attributes {stable_mosaic.version = 11 : i64} {
  func.func @kernel(%arg0: memref<2x4x16x16xf32, #tpu.memory_space<any>>, %arg1: memref<2x4x16x16xf32, #tpu.memory_space<any>>, %arg2: memref<1x!tpu.dma_semaphore, #tpu.memory_space<semaphore_mem>>) attributes {dimension_semantics = [], scalar_prefetch = 0 : i64, scratch_operands = 1 : i64, tpu.core_type = #tpu.core_type<tc>} {
    %c0_i32 = arith.constant 0 : i32
    %0 = tpu.memref_slice %arg2[%c0_i32] : memref<1x!tpu.dma_semaphore, #tpu.memory_space<semaphore_mem>> -> memref<1x!tpu.dma_semaphore, #tpu.memory_space<semaphore_mem>>
    %1 = tpu.memref_squeeze %0 : memref<1x!tpu.dma_semaphore, #tpu.memory_space<semaphore_mem>> -> memref<!tpu.dma_semaphore, #tpu.memory_space<semaphore_mem>>
    tpu.enqueue_dma source(%arg0 : memref<2x4x16x16xf32, #tpu.memory_space<any>>) target(%arg1 : memref<2x4x16x16xf32, #tpu.memory_space<any>>) target_semaphore(%1 : memref<!tpu.dma_semaphore, #tpu.memory_space<semaphore_mem>>)
    %c0_i32_0 = arith.constant 0 : i32
    %2 = tpu.memref_slice %arg2[%c0_i32_0] : memref<1x!tpu.dma_semaphore, #tpu.memory_space<semaphore_mem>> -> memref<1x!tpu.dma_semaphore, #tpu.memory_space<semaphore_mem>>
    %3 = tpu.memref_squeeze %2 : memref<1x!tpu.dma_semaphore, #tpu.memory_space<semaphore_mem>> -> memref<!tpu.dma_semaphore, #tpu.memory_space<semaphore_mem>>
    tpu.wait_dma2 semaphore(%3 : memref<!tpu.dma_semaphore, #tpu.memory_space<semaphore_mem>>) src(%arg0 : memref<2x4x16x16xf32, #tpu.memory_space<any>>) dst(%arg1 : memref<2x4x16x16xf32, #tpu.memory_space<any>>)
    return
  }
}

</mosaic_0001>

<llo_original>
// kernel: tpu_custom_call.1
$region0: #{tpu_custom_call.1}
  #allocation0 [shape = 'u32[]', space=smem, size = 0x4, offset = 0x4, fixed_abs, tag = 'smem constant byte address 0x4 - core index']
  #allocation1 [shape = 'u32[72,128]{1,0:T(1,128)}', space=vmem, size = 0x9000, scoped, tag = 'internal scratch']
  #allocation2 [shape = 's32[1]{0}', space=sflag, size = 0x4, scoped, tag = 'scratch operand']
  #allocation3 [shape = 's32[]', space=sflag, size = 0x4, offset = 0, fixed_abs, tag = 'sflag constant byte address 0x0 - dummy sync flag']
  #allocation4 [shape = 'u32[0]{0}', space=smem, size = 0, offset = 0, fixed_abs, tag = 'smem constant byte address 0x0 - null']
  %s0 = inlined_call_operand.hbm [shape: f32[2,4,16,16], index: 0, kind: input, shape index: {}]
  %s1 = inlined_call_operand.hbm [shape: f32[2,4,16,16], index: 1, kind: output, shape index: {}]
  %s2 = sld [smem:[#allocation0]]
  $region2: #{tpu_custom_call.1} parent=0
    _
  %s4 = ssub.s32 1, %s2
  %s5 = scalar_select 0, %s4, %s2
  %s7 = sshll.u32 1, 14
  %s8 = sxor.u32 4294967295, %s7
  %s10 = sshll.u32 %s0, 4
  %s11 = int_to_ptr.hbm [resolvable:$true] %s10
  %s12 = sshll.u32 %s1, 4
  %s13 = int_to_ptr.hbm [resolvable:$true] %s12
  %16 = dma.general %s11, 2048, %s13, [#allocation2], [#allocation3], [#allocation4], 0, 0
  %s17 = smul.u32 2, 4
  %s18 = smul.u32 %s17, 16
  %s19 = smul.u32 %s18, 1
  %s20 = sshll.u32 %s19, 4
  %21 = dma.done [#allocation2], %s20
  %22 = vsyncmov [#allocation2]
  %s23 = vpop.sfrf %22
  %p24 = scmp.eq.s32.totalorder %s23, 0
  %p25 = pneg %p24
  %27 = shalt.err (%p25)

</llo_original>
